<compile_context>
chip_gen: v7x
topology: tpu7x:2x2x1
jax: 0.10.0
libtpu: 0.0.40
codegen_flags: <defaults>
</compile_context>

<pallas_src>
from functools import partial
import math

import jax
import jax.numpy as jnp
from jax import lax
from jax.experimental import pallas as pl
from jax.experimental.pallas import tpu as pltpu


def _round_up(a, b):
    return (a + b - 1) // b * b


def _vmem_limit_bytes():
    cap = 128 * 1024 * 1024
    try:
        info = pltpu.get_tpu_info()
        cap = int(getattr(info, "vmem_capacity_bytes", cap))
    except Exception:
        pass
    # ~3/4 of physical VMEM, capped at 96 MiB (=> ~48 MiB on 64-MiB v7x,
    # 96 MiB on 128-MiB v5e/v6e).
    return int(min(cap * 3 // 4, 96 * 1024 * 1024))


def _downsample_kernel(x_ref, h_ref, w_ref, b_ref, o_ref, *, th, wp, c4, ct,
                       mask_col0):
    """One (batch n, row-tile r, cout-tile co) grid step.

    x_ref: (1, th, wp, c4)  th output rows of input; lanes = 2x2 pixel block x Cin
    h_ref: (1, 1, wp, c4)   halo row-pair (r*th - 1); junk for r == 0 (masked)
    w_ref: (4, c4, ct)      fused tap weights: [unshifted, col-shift, row-shift,
                            row+col-shift] matrices
    b_ref: (1, ct)          f32 bias slice
    o_ref: (1, th, wp, ct)  NHWC output tile
    """
    r = pl.program_id(1)
    m = th * wp

    x3 = x_ref[0]                                   # (th, wp, c4)
    x2 = x3.reshape(m, c4)                          # view (wp % 8 == 0)

    # --- column shift: folded column j-1 (input cols 2j-2, 2j-1) -------------
    # One XLU sublane rotation over the whole block.  The wrapped-around column
    # only needs masking when there is no zero pad column to absorb it.
    xs2 = pltpu.roll(x2, 1, axis=0)
    if mask_col0:
        ridx = lax.broadcasted_iota(jnp.int32, (m, c4), 0)
        xs2 = jnp.where(ridx % wp == 0, jnp.zeros_like(xs2), xs2)
    xs3 = xs2.reshape(th, wp, c4)

    # --- halo row-pair (previous tile's last pair); zero for the first tile --
    h3 = jnp.where(r > 0, h_ref[0], jnp.zeros_like(h_ref[0]))       # (1, wp, c4)
    hs2 = pltpu.roll(h3.reshape(wp, c4), 1, axis=0)
    if mask_col0:
        hidx = lax.broadcasted_iota(jnp.int32, (wp, c4), 0)
        hs2 = jnp.where(hidx == 0, jnp.zeros_like(hs2), hs2)
    hs3 = hs2.reshape(1, wp, c4)

    # --- row shift: previous row-pair (input rows 2i-2, 2i-1), halo on top ---
    if th > 1:
        xr3 = jnp.concatenate([h3, x3[:th - 1]], axis=0)
        xrs3 = jnp.concatenate([hs3, xs3[:th - 1]], axis=0)
    else:
        xr3, xrs3 = h3, hs3
    xr2 = xr3.reshape(m, c4)
    xrs2 = xrs3.reshape(m, c4)

    # --- four accumulating MXU matmuls cover all nine taps (f32 accumulate) --
    # TODO(synk): when compute-bound (Cin >= ~512) slice out the structurally
    # zero rows of w_ref[1:] to recover the wasted MXU K.
    acc = jnp.dot(x2, w_ref[0], preferred_element_type=jnp.float32)
    acc = acc + jnp.dot(xs2, w_ref[1], preferred_element_type=jnp.float32)
    acc = acc + jnp.dot(xr2, w_ref[2], preferred_element_type=jnp.float32)
    acc = acc + jnp.dot(xrs2, w_ref[3], preferred_element_type=jnp.float32)
    acc = acc + b_ref[...]
    o_ref[...] = acc.reshape(1, th, wp, ct).astype(o_ref.dtype)


def downsample_pallas(x, weight, bias, t=None, *, tile_h=None, cout_tile=None,
                      data_format="NCHW"):
    """Conv2d(C, C, (3,3), stride (2,2), padding (1,1)) — PyTorch `Downsample`.

    x      : (N, C, H, W) if data_format == "NCHW" (PyTorch), else (N, H, W, C)
    weight : (Cout, Cin, 3, 3)  PyTorch Conv2d weight layout
    bias   : (Cout,)
    t      : ignored (matches Downsample.forward)
    returns: (N, Cout, ceil(H/2), ceil(W/2)) for NCHW, NHWC otherwise.
    """
    del t
    assert data_format in ("NCHW", "NHWC")
    if data_format == "NCHW":
        N, C, H, W = x.shape
    else:
        N, H, W, C = x.shape
    Cout, Cin, KH, KW = weight.shape
    assert (Cin, KH, KW) == (C, 3, 3)

    dt = x.dtype
    dtb = jnp.dtype(dt).itemsize
    Hout, Wout = (H + 1) // 2, (W + 1) // 2
    Wp = _round_up(Wout, 8)        # keeps in-kernel reshapes (8,128)-tile views
    C4 = 4 * C                     # lanes: 2x2 input pixel block x Cin
    # TODO(synk): for very small Cin (< 32) fold 4 width positions into lanes
    # (and pair output columns) to fill lane vregs more densely.

    vmem_limit = _vmem_limit_bytes()

    # ---- Cout tiling: keep the resident fused-weight slice small (v7x). -----
    if cout_tile is not None:
        ct = int(cout_tile)
    else:
        ct = Cout
        if 4 * C4 * Cout * dtb > (8 << 20) and Cout % 128 == 0:
            ct = 128
            while Cout % (2 * ct) == 0 and 4 * C4 * 2 * ct * dtb <= (4 << 20):
                ct *= 2
    assert Cout % ct == 0, "cout_tile must divide Cout"
    assert ct == Cout or ct % 128 == 0, "partial Cout tiles must be x128"
    CO = Cout // ct

    # ---- Row-tile size: largest tile whose full working set (double-buffered
    #      blocks + shifted in-kernel copies + f32 accumulator) fits budget. ---
    if tile_h is None:
        budget = min(vmem_limit // 2, 32 << 20)
        per_row = (Wp * C4 * dtb) * 5 + (Wp * ct * dtb) * 2 + Wp * ct * 4
        fixed = 2 * (4 * C4 * ct * dtb) + 2 * (Wp * C4 * dtb) + (1 << 20)
        th = max(1, (budget - fixed) // per_row) if budget > fixed else 1
        th = min(th, Hout)
        if th < Hout:                       # keep M = th*Wp MXU-friendly
            align = max(1, 256 // Wp)
            if th >= align:
                th = (th // align) * align
    else:
        th = int(tile_h)
    th = max(1, min(th, Hout))
    R = -(-Hout // th)                      # cdiv: last tile may overrun (padded)
    Hp = R * th

    # ---- Fold 2x2 input pixel blocks into the lane dim (one XLA transpose). --
    ph, pw = 2 * Hp - H, 2 * Wp - W
    if data_format == "NCHW":
        xp = jnp.pad(x, ((0, 0), (0, 0), (0, ph), (0, pw)))
        xf = xp.reshape(N, C, Hp, 2, Wp, 2)
        xf = jnp.transpose(xf, (0, 2, 4, 3, 5, 1)).reshape(N, Hp, Wp, C4)
    else:
        xp = jnp.pad(x, ((0, 0), (0, ph), (0, pw), (0, 0)))
        xf = xp.reshape(N, Hp, 2, Wp, 2, C)
        xf = jnp.transpose(xf, (0, 1, 3, 2, 4, 5)).reshape(N, Hp, Wp, C4)

    # ---- Fused tap weights: 4 matrices of shape (4*Cin, Cout). ---------------
    # Lane layout of the folded input is [rr=0|cc=0, rr=0|cc=1, rr=1|cc=0,
    # rr=1|cc=1] x Cin, where (rr, cc) index the 2x2 pixel block.
    wt = jnp.transpose(weight, (2, 3, 1, 0)).astype(dt)          # (3, 3, Cin, Cout)
    z = jnp.zeros((Cin, Cout), dt)
    w_x = jnp.concatenate([wt[1, 1], wt[1, 2], wt[2, 1], wt[2, 2]], axis=0)
    w_xs = jnp.concatenate([z, wt[1, 0], z, wt[2, 0]], axis=0)
    w_xr = jnp.concatenate([z, z, wt[0, 1], wt[0, 2]], axis=0)
    w_xrs = jnp.concatenate([z, z, z, wt[0, 0]], axis=0)
    wmat = jnp.stack([w_x, w_xs, w_xr, w_xrs], axis=0)           # (4, 4*Cin, Cout)
    bmat = bias.astype(jnp.float32).reshape(1, Cout)

    kernel = partial(_downsample_kernel, th=th, wp=Wp, c4=C4, ct=ct,
                     mask_col0=(Wp == Wout))
    out = pl.pallas_call(
        kernel,
        out_shape=jax.ShapeDtypeStruct((N, Hp, Wp, Cout), dt),
        grid=(N, R, CO),
        in_specs=[
            pl.BlockSpec((1, th, Wp, C4), lambda n, r, co: (n, r, 0, 0)),
            pl.BlockSpec((1, 1, Wp, C4),
                         lambda n, r, co: (n, jnp.maximum(r * th - 1, 0), 0, 0)),
            pl.BlockSpec((4, C4, ct), lambda n, r, co: (0, 0, co)),
            pl.BlockSpec((1, ct), lambda n, r, co: (0, co)),
        ],
        out_specs=pl.BlockSpec((1, th, Wp, ct), lambda n, r, co: (n, r, 0, co)),
        compiler_params=pltpu.CompilerParams(
            dimension_semantics=("parallel", "parallel", "parallel"),
            vmem_limit_bytes=vmem_limit),
    )(xf, xf, wmat, bmat)

    out = out[:, :Hout, :Wout, :]
    if data_format == "NCHW":
        out = jnp.transpose(out, (0, 3, 1, 2))
    return out


def ref_downsample(x_nchw, weight, bias):
    """Pure-JAX reference: Conv2d(k=3, s=2, p=1) in NCHW."""
    out = lax.conv_general_dilated(
        x_nchw, weight, window_strides=(2, 2), padding=((1, 1), (1, 1)),
        dimension_numbers=("NCHW", "OIHW", "NCHW"))
    return out + bias[None, :, None, None]


if __name__ == "__main__":
    # ---- Small config matching the module (batch=2, channels=4, 16x16). -----
    N, C, H, W = 2, 4, 16, 16
    key = jax.random.PRNGKey(0)
    kx, kw_, kb = jax.random.split(key, 3)

    x = jax.random.normal(kx, (N, C, H, W), dtype=jnp.float32)
    fan = C * 3 * 3
    lim = 1.0 / math.sqrt(fan)
    weight = jax.random.uniform(kw_, (C, C, 3, 3), minval=-lim, maxval=lim,
                                dtype=jnp.float32)
    bias = jax.random.uniform(kb, (C,), minval=-lim, maxval=lim,
                              dtype=jnp.float32)

    ref = jax.block_until_ready(ref_downsample(x, weight, bias))

    # f32, auto row tile (single tile -> zero-halo branch).
    out = jax.block_until_ready(downsample_pallas(x, weight, bias))
    assert out.shape == (N, C, H // 2, W // 2), out.shape
    # Tolerance accounts for MXU default-precision f32 matmul vs XLA conv.
    assert jnp.allclose(out, ref, atol=2e-2, rtol=2e-2), \
        float(jnp.max(jnp.abs(out - ref)))

    # f32, forced non-dividing row tile: exercises the cdiv/pad path + halo DMA.
    out_t = jax.block_until_ready(downsample_pallas(x, weight, bias, tile_h=3))
    assert jnp.allclose(out_t, ref, atol=2e-2, rtol=2e-2), \
        float(jnp.max(jnp.abs(out_t - ref)))

    # bf16 MXU-operand path (f32 accumulation), loose tolerance.
    out_bf = jax.block_until_ready(
        downsample_pallas(x.astype(jnp.bfloat16), weight.astype(jnp.bfloat16),
                          bias, tile_h=2))
    assert jnp.allclose(out_bf.astype(jnp.float32), ref, atol=1e-1, rtol=1e-1), \
        float(jnp.max(jnp.abs(out_bf.astype(jnp.float32) - ref)))

    # NHWC entry point (skips the output NCHW transpose).
    out_nhwc = jax.block_until_ready(
        downsample_pallas(jnp.transpose(x, (0, 2, 3, 1)), weight, bias,
                          data_format="NHWC"))
    assert jnp.allclose(jnp.transpose(out_nhwc, (0, 3, 1, 2)), ref,
                        atol=2e-2, rtol=2e-2)

    # Larger-channel config exercising the Cout-tiled grid axis (v7x-style).
    Nb, Cb, Hb, Wb = 1, 256, 16, 16
    kx2, kw2, kb2 = jax.random.split(jax.random.PRNGKey(1), 3)
    xb = jax.random.normal(kx2, (Nb, Cb, Hb, Wb), dtype=jnp.float32)
    limb = 1.0 / math.sqrt(Cb * 9)
    wb = jax.random.uniform(kw2, (Cb, Cb, 3, 3), minval=-limb, maxval=limb,
                            dtype=jnp.float32)
    bb = jax.random.uniform(kb2, (Cb,), minval=-limb, maxval=limb,
                            dtype=jnp.float32)
    refb = jax.block_until_ready(ref_downsample(xb, wb, bb))
    outb = jax.block_until_ready(downsample_pallas(xb, wb, bb, cout_tile=128))
    assert jnp.allclose(outb, refb, atol=3e-2, rtol=3e-2), \
        float(jnp.max(jnp.abs(outb - refb)))

    print("KERNEL_OK")
</pallas_src>

<mosaic_0001>
module attributes {stable_mosaic.version = 11 : i64} {
  func.func @_downsample_kernel(%arg0: i32, %arg1: i32, %arg2: i32, %arg3: memref<1x8x8x16xf32, #tpu.memory_space<vmem>>, %arg4: memref<1x1x8x16xf32, #tpu.memory_space<vmem>>, %arg5: memref<4x16x4xf32, #tpu.memory_space<vmem>>, %arg6: memref<1x4xf32, #tpu.memory_space<vmem>>, %arg7: memref<1x8x8x4xf32, #tpu.memory_space<vmem>>) attributes {dimension_semantics = [#tpu.dimension_semantics<parallel>, #tpu.dimension_semantics<parallel>, #tpu.dimension_semantics<parallel>], iteration_bounds = array<i64: 2, 1, 1>, scalar_prefetch = 0 : i64, scratch_operands = 0 : i64, tpu.core_type = #tpu.core_type<tc>, window_params = [{transform_indices = @transform_0, window_bounds = array<i64: 1, 8, 8, 16>}, {transform_indices = @transform_1, window_bounds = array<i64: 1, 1, 8, 16>}, {transform_indices = @transform_2, window_bounds = array<i64: 4, 16, 4>}, {transform_indices = @transform_3, window_bounds = array<i64: 1, 4>}, {transform_indices = @transform_4, window_bounds = array<i64: 1, 8, 8, 4>}]} {
    %c0 = arith.constant 0 : index
    %c0_0 = arith.constant 0 : index
    %c0_1 = arith.constant 0 : index
    %c0_2 = arith.constant 0 : index
    %0 = vector.load %arg3[%c0, %c0_0, %c0_1, %c0_2] : memref<1x8x8x16xf32, #tpu.memory_space<vmem>>, vector<1x8x8x16xf32>
    %1 = vector.shape_cast %0 : vector<1x8x8x16xf32> to vector<8x8x16xf32>
    %2 = vector.shape_cast %1 : vector<8x8x16xf32> to vector<64x16xf32>
    %c1_i32 = arith.constant 1 : i32
    %3 = tpu.dynamic_rotate %2 by %c1_i32 dim 0 : vector<64x16xf32>, i32 -> vector<64x16xf32>
    %4 = tpu.iota {dimensions = array<i32: 0>} : vector<64x16xi32>
    %c8_i32 = arith.constant 8 : i32
    %c0_i32 = arith.constant 0 : i32
    %5 = arith.cmpi eq, %c8_i32, %c0_i32 : i32
    %c1_i32_3 = arith.constant 1 : i32
    %6 = arith.select %5, %c1_i32_3, %c8_i32 : i32
    %7 = vector.broadcast %6 : i32 to vector<64x16xi32>
    %8 = arith.remsi %4, %7 : vector<64x16xi32>
    %c0_i32_4 = arith.constant 0 : i32
    %9 = vector.broadcast %c0_i32_4 : i32 to vector<64x16xi32>
    %10 = arith.cmpi ne, %8, %9 : vector<64x16xi32>
    %c0_i32_5 = arith.constant 0 : i32
    %11 = vector.broadcast %c0_i32_5 : i32 to vector<64x16xi32>
    %12 = arith.cmpi slt, %8, %11 : vector<64x16xi32>
    %c0_i32_6 = arith.constant 0 : i32
    %13 = arith.cmpi slt, %6, %c0_i32_6 : i32
    %14 = vector.broadcast %13 : i1 to vector<64x16xi1>
    %15 = vector.broadcast %14 : vector<64x16xi1> to vector<64x16xi1>
    %16 = arith.xori %12, %15 : vector<64x16xi1>
    %17 = arith.andi %16, %10 : vector<64x16xi1>
    %18 = vector.broadcast %6 : i32 to vector<64x16xi32>
    %19 = arith.addi %8, %18 : vector<64x16xi32>
    %20 = arith.select %17, %19, %8 : vector<64x16xi1>, vector<64x16xi32>
    %c0_i32_7 = arith.constant 0 : i32
    %21 = vector.broadcast %c0_i32_7 : i32 to vector<64x16xi32>
    %22 = arith.cmpi eq, %20, %21 : vector<64x16xi32>
    %cst = arith.constant 0.000000e+00 : f32
    %23 = vector.broadcast %cst : f32 to vector<64x16xf32>
    %24 = arith.select %22, %23, %3 : vector<64x16xi1>, vector<64x16xf32>
    %25 = vector.shape_cast %24 : vector<64x16xf32> to vector<8x8x16xf32>
    %c0_i32_8 = arith.constant 0 : i32
    %26 = arith.cmpi sgt, %arg1, %c0_i32_8 : i32
    %c0_9 = arith.constant 0 : index
    %c0_10 = arith.constant 0 : index
    %c0_11 = arith.constant 0 : index
    %c0_12 = arith.constant 0 : index
    %27 = vector.load %arg4[%c0_9, %c0_10, %c0_11, %c0_12] : memref<1x1x8x16xf32, #tpu.memory_space<vmem>>, vector<1x1x8x16xf32>
    %28 = vector.shape_cast %27 : vector<1x1x8x16xf32> to vector<1x8x16xf32>
    %cst_13 = arith.constant 0.000000e+00 : f32
    %29 = vector.broadcast %cst_13 : f32 to vector<1x8x16xf32>
    %30 = arith.select %26, %28, %29 : vector<1x8x16xf32>
    %31 = vector.shape_cast %30 : vector<1x8x16xf32> to vector<8x16xf32>
    %c1_i32_14 = arith.constant 1 : i32
    %32 = tpu.dynamic_rotate %31 by %c1_i32_14 dim 0 : vector<8x16xf32>, i32 -> vector<8x16xf32>
    %33 = tpu.iota {dimensions = array<i32: 0>} : vector<8x16xi32>
    %c0_i32_15 = arith.constant 0 : i32
    %34 = vector.broadcast %c0_i32_15 : i32 to vector<8x16xi32>
    %35 = arith.cmpi eq, %33, %34 : vector<8x16xi32>
    %cst_16 = arith.constant 0.000000e+00 : f32
    %36 = vector.broadcast %cst_16 : f32 to vector<8x16xf32>
    %37 = arith.select %35, %36, %32 : vector<8x16xi1>, vector<8x16xf32>
    %38 = vector.shape_cast %37 : vector<8x16xf32> to vector<1x8x16xf32>
    %39 = vector.extract_strided_slice %1 {offsets = [0, 0, 0], sizes = [7, 8, 16], strides = [1, 1, 1]} : vector<8x8x16xf32> to vector<7x8x16xf32>
    %40 = tpu.concatenate %30, %39 in 0 : vector<1x8x16xf32>, vector<7x8x16xf32> -> vector<8x8x16xf32>
    %41 = vector.extract_strided_slice %25 {offsets = [0, 0, 0], sizes = [7, 8, 16], strides = [1, 1, 1]} : vector<8x8x16xf32> to vector<7x8x16xf32>
    %42 = tpu.concatenate %38, %41 in 0 : vector<1x8x16xf32>, vector<7x8x16xf32> -> vector<8x8x16xf32>
    %43 = vector.shape_cast %40 : vector<8x8x16xf32> to vector<64x16xf32>
    %44 = vector.shape_cast %42 : vector<8x8x16xf32> to vector<64x16xf32>
    %c0_17 = arith.constant 0 : index
    %c0_18 = arith.constant 0 : index
    %c0_19 = arith.constant 0 : index
    %45 = vector.load %arg5[%c0_17, %c0_18, %c0_19] : memref<4x16x4xf32, #tpu.memory_space<vmem>>, vector<1x16x4xf32>
    %46 = vector.shape_cast %45 : vector<1x16x4xf32> to vector<16x4xf32>
    %cst_20 = arith.constant dense<0.000000e+00> : vector<64x4xf32>
    %47 = tpu.matmul %2, %46, %cst_20 {dimension_numbers = #tpu.dot_dimension_numbers<[1], [0], [0], [1], [0, 0, 1, 1], [], []>} : vector<64x16xf32>, vector<16x4xf32>, vector<64x4xf32> -> vector<64x4xf32>
    %c1 = arith.constant 1 : index
    %c0_21 = arith.constant 0 : index
    %c0_22 = arith.constant 0 : index
    %48 = vector.load %arg5[%c1, %c0_21, %c0_22] : memref<4x16x4xf32, #tpu.memory_space<vmem>>, vector<1x16x4xf32>
    %49 = vector.shape_cast %48 : vector<1x16x4xf32> to vector<16x4xf32>
    %cst_23 = arith.constant dense<0.000000e+00> : vector<64x4xf32>
    %50 = tpu.matmul %24, %49, %cst_23 {dimension_numbers = #tpu.dot_dimension_numbers<[1], [0], [0], [1], [0, 0, 1, 1], [], []>} : vector<64x16xf32>, vector<16x4xf32>, vector<64x4xf32> -> vector<64x4xf32>
    %51 = arith.addf %47, %50 : vector<64x4xf32>
    %c2 = arith.constant 2 : index
    %c0_24 = arith.constant 0 : index
    %c0_25 = arith.constant 0 : index
    %52 = vector.load %arg5[%c2, %c0_24, %c0_25] : memref<4x16x4xf32, #tpu.memory_space<vmem>>, vector<1x16x4xf32>
    %53 = vector.shape_cast %52 : vector<1x16x4xf32> to vector<16x4xf32>
    %cst_26 = arith.constant dense<0.000000e+00> : vector<64x4xf32>
    %54 = tpu.matmul %43, %53, %cst_26 {dimension_numbers = #tpu.dot_dimension_numbers<[1], [0], [0], [1], [0, 0, 1, 1], [], []>} : vector<64x16xf32>, vector<16x4xf32>, vector<64x4xf32> -> vector<64x4xf32>
    %55 = arith.addf %51, %54 : vector<64x4xf32>
    %c3 = arith.constant 3 : index
    %c0_27 = arith.constant 0 : index
    %c0_28 = arith.constant 0 : index
    %56 = vector.load %arg5[%c3, %c0_27, %c0_28] : memref<4x16x4xf32, #tpu.memory_space<vmem>>, vector<1x16x4xf32>
    %57 = vector.shape_cast %56 : vector<1x16x4xf32> to vector<16x4xf32>
    %cst_29 = arith.constant dense<0.000000e+00> : vector<64x4xf32>
    %58 = tpu.matmul %44, %57, %cst_29 {dimension_numbers = #tpu.dot_dimension_numbers<[1], [0], [0], [1], [0, 0, 1, 1], [], []>} : vector<64x16xf32>, vector<16x4xf32>, vector<64x4xf32> -> vector<64x4xf32>
    %59 = arith.addf %55, %58 : vector<64x4xf32>
    %c0_30 = arith.constant 0 : index
    %c0_31 = arith.constant 0 : index
    %60 = vector.load %arg6[%c0_30, %c0_31] : memref<1x4xf32, #tpu.memory_space<vmem>>, vector<1x4xf32>
    %61 = vector.broadcast %60 : vector<1x4xf32> to vector<64x4xf32>
    %62 = arith.addf %59, %61 : vector<64x4xf32>
    %63 = vector.shape_cast %62 : vector<64x4xf32> to vector<1x8x8x4xf32>
    %c0_32 = arith.constant 0 : index
    %c0_33 = arith.constant 0 : index
    %c0_34 = arith.constant 0 : index
    %c0_35 = arith.constant 0 : index
    %64 = vector.load %arg7[%c0_32, %c0_33, %c0_34, %c0_35] : memref<1x8x8x4xf32, #tpu.memory_space<vmem>>, vector<1x8x8x4xf32>
    tpu.vector_store %arg7[%c0_32, %c0_33, %c0_34, %c0_35], %63 {strides = array<i32>} : memref<1x8x8x4xf32, #tpu.memory_space<vmem>>, vector<1x8x8x4xf32>,
    return
  }
  func.func @transform_0(%arg0: i32, %arg1: i32, %arg2: i32) -> (i32, i32, i32, i32) {
    %c0_i32 = arith.constant 0 : i32
    %c0_i32_0 = arith.constant 0 : i32
    %c0_i32_1 = arith.constant 0 : i32
    return %arg0, %arg1, %c0_i32, %c0_i32_0 : i32, i32, i32, i32
  }
  func.func @transform_1(%arg0: i32, %arg1: i32, %arg2: i32) -> (i32, i32, i32, i32) {
    %c8_i32 = arith.constant 8 : i32
    %0 = arith.muli %arg1, %c8_i32 : i32
    %c1_i32 = arith.constant 1 : i32
    %1 = arith.subi %0, %c1_i32 : i32
    %c0_i32 = arith.constant 0 : i32
    %2 = arith.maxsi %1, %c0_i32 : i32
    %c0_i32_0 = arith.constant 0 : i32
    %c0_i32_1 = arith.constant 0 : i32
    %c0_i32_2 = arith.constant 0 : i32
    return %arg0, %2, %c0_i32_0, %c0_i32_1 : i32, i32, i32, i32
  }
  func.func @transform_2(%arg0: i32, %arg1: i32, %arg2: i32) -> (i32, i32, i32) {
    %c0_i32 = arith.constant 0 : i32
    %c0_i32_0 = arith.constant 0 : i32
    %c0_i32_1 = arith.constant 0 : i32
    return %c0_i32, %c0_i32_0, %arg2 : i32, i32, i32
  }
  func.func @transform_3(%arg0: i32, %arg1: i32, %arg2: i32) -> (i32, i32) {
    %c0_i32 = arith.constant 0 : i32
    %c0_i32_0 = arith.constant 0 : i32
    return %c0_i32, %arg2 : i32, i32
  }
  func.func @transform_4(%arg0: i32, %arg1: i32, %arg2: i32) -> (i32, i32, i32, i32) {
    %c0_i32 = arith.constant 0 : i32
    %c0_i32_0 = arith.constant 0 : i32
    return %arg0, %arg1, %c0_i32, %arg2 : i32, i32, i32, i32
  }
}

</mosaic_0001>

<llo_original>
// kernel: tpu_custom_call.1
$region0: #{tpu_custom_call.1}
  #allocation0 [shape = 'u32[]', space=smem, size = 0x4, offset = 0x4, fixed_abs, tag = 'smem constant byte address 0x4 - core index']
  #allocation1 [shape = 'u32[144,128]{1,0:T(1,128)}', space=vmem, size = 0x12000, scoped, tag = 'internal scratch']
  %s0 = inlined_call_operand.hbm [shape: f32[2,8,8,16], index: 0, kind: input, shape index: {}]
  %s1 = inlined_call_operand.hbm [shape: f32[2,8,8,16], index: 1, kind: input, shape index: {}]
  %s2 = inlined_call_operand.hbm [shape: f32[4,16,4], index: 2, kind: input, shape index: {}]
  %s3 = inlined_call_operand.hbm [shape: f32[1,4], index: 3, kind: input, shape index: {}]
  %s4 = inlined_call_operand.hbm [shape: f32[2,8,8,4], index: 4, kind: output, shape index: {}]
  %s5 = sld [smem:[#allocation0]]
  $region65: #{tpu_custom_call.1} parent=0
    _
  %s7 = ssub.s32 1, %s5
  %s8 = scalar_select 0, %s7, %s5
  $region1: #{tpu_custom_call.1} parent=0
    #allocation2 [shape = 'u8[65536]{0}', space=vmem, size = 0x10000, scoped, tag = 'input window, operand 0']
    #allocation3 [shape = 's32[2]{0}', space=sflag, size = 0x8, scoped, tag = 'scoped memory for tpu_custom_call.1']
    #allocation4 [shape = 's32[2]{0}', space=sflag, size = 0x8, scoped, tag = 'scoped memory for tpu_custom_call.1']
    #allocation5 [shape = 'u8[8192]{0}', space=vmem, size = 0x2000, scoped, tag = 'input window, operand 1']
    #allocation6 [shape = 's32[2]{0}', space=sflag, size = 0x8, scoped, tag = 'scoped memory for tpu_custom_call.1']
    #allocation7 [shape = 'u8[32768]{0}', space=vmem, size = 0x8000, scoped, tag = 'input window, operand 2, single buffered']
    #allocation8 [shape = 'u8[512]{0}', space=vmem, size = 0x400, scoped, tag = 'input window, operand 3, single buffered']
    #allocation9 [shape = 's32[1]{0}', space=sflag, size = 0x4, scoped, tag = 'scoped memory for tpu_custom_call.1']
    #allocation10 [shape = 'u8[65536]{0}', space=vmem, size = 0x10000, scoped, tag = 'output window, operand 0']
    %9 = vsyncpa [#allocation3], 0
    %s10 = scalar_lea.sflag [#allocation3], 1
    %11 = vsyncpa %s10, 0
    %12 = vsyncpa [#allocation6], 0
    %s13 = scalar_lea.sflag [#allocation6], 1
    %14 = vsyncpa %s13, 0
    %15 = vsyncpa [#allocation9], 0
    %16 = vsyncpa [#allocation4], 0
    %s17 = scalar_lea.sflag [#allocation4], 1
    %18 = vsyncpa %s17, 0
    loop: start=0, step=1, limit=4
    $region2: #{tpu_custom_call.1} parent=1 // loop_pre_header
      _
    $region3: #{tpu_custom_call.1} parent=1 // loop_header
      %s20 = sphi 0, %s24
      %p21 = scmp.ge.s32.totalorder %s20, 4
      %s27 = sphi 0, %s46
      %s28 = sphi 0, %s42
      %s29 = sphi 0, %s38
      %s30 = sphi 0, %s27
      %s31 = sphi 0, %s28
      %s32 = sphi 0, %s29
      %s33 = sphi 0, %s30
      %s34 = sphi 0, %s31
      %s35 = sphi 0, %s32
      %s51 = sphi 0, %s53
      %s54 = sphi 0, %s51
      %s55 = sphi 0, %s54
      %s71 = sphi 0, %s55
      %s87 = sphi 0, %s89
      %s90 = sphi 0, %s87
      %s91 = sphi 0, %s90
      %s107 = sphi 0, %s91
      %s113 = sphi 0, %s115
      %s116 = sphi 0, %s113
      %s117 = sphi 0, %s116
      %s133 = sphi 0, %s117
      %s139 = sphi 0, %s141
      %s142 = sphi 0, %s139
      %s143 = sphi 0, %s142
      %s159 = sphi 0, %s143
      %s169 = sphi 0, %s171
      %s172 = sphi 0, %s169
      %s173 = sphi 0, %s172
      %s189 = sphi 0, %s173
    $region4: #{tpu_custom_call.1} parent=1 // loop_header_branch
      %23 = sbr.rel (%p21) target = $region8
    $region5: #{tpu_custom_call.1} parent=1 // loop_body
      %s25 = ssub.s32 %s20, 1
      %s26 = ssub.s32 %s20, 2
      %s36 = sadd.s32 1, %s29
      %p37 = scmp.ge.s32.totalorder %s36, 1
      %s38 = scalar_select %p37, 0, %s36
      %s39 = sadd.s32 1, %s28
      %s40 = scalar_select %p37, %s39, %s28
      %p41 = scmp.ge.s32.totalorder %s40, 1
      %s42 = scalar_select %p41, 0, %s40
      %s43 = sadd.s32 1, %s27
      %s44 = scalar_select %p41, %s43, %s27
      %p45 = scmp.ge.s32.totalorder %s44, 2
      %s46 = scalar_select %p45, 0, %s44
      %s47 = ssub.s32 %s27, %s46
      %s48 = ssub.s32 %s28, %s42
      %s49 = sor.u32 %s47, %s48
      %p50 = scmp.eq.s32.totalorder %s49, 0
      %s52 = sadd.s32 %s51, 1
      %s53 = scalar_select %p50, %s51, %s52
      %p56 = pneg %p50
      %p57 = scmp.eq.s32.totalorder %s20, 1
      %p58 = por %p56, %p57
      %p59 = scmp.ne.s32.totalorder %s51, %s54
      %p60 = scmp.eq.s32.totalorder %s20, 0
      %p61 = por %p59, %p60
      %p62 = scmp.ne.s32.totalorder %s51, %s54
      %p63 = scmp.eq.s32.totalorder %s25, 1
      %p64 = por %p62, %p63
      %p65 = scmp.ne.s32.totalorder %s54, %s55
      %p66 = scmp.eq.s32.totalorder %s25, 0
      %p67 = por %p65, %p66
      %p68 = scmp.ne.s32.totalorder %s54, %s55
      %p69 = scmp.eq.s32.totalorder %s26, 1
      %p70 = por %p68, %p69
      %p72 = scmp.ne.s32.totalorder %s55, %s71
      %p73 = scmp.eq.s32.totalorder %s26, 0
      %p74 = por %p72, %p73
      %s75 = smul.u32 %s28, 8
      %s76 = ssub.s32 %s75, 1
      %p77 = scmp.gt.s32.totalorder %s76, 0
      %s78 = scalar_select %p77, %s76, 0
      %s79 = smul.u32 %s42, 8
      %s80 = ssub.s32 %s79, 1
      %p81 = scmp.gt.s32.totalorder %s80, 0
      %s82 = scalar_select %p81, %s80, 0
      %s83 = ssub.s32 %s27, %s46
      %s84 = ssub.s32 %s78, %s82
      %s85 = sor.u32 %s83, %s84
      %p86 = scmp.eq.s32.totalorder %s85, 0
      %s88 = sadd.s32 %s87, 1
      %s89 = scalar_select %p86, %s87, %s88
      %p92 = pneg %p86
      %p93 = scmp.eq.s32.totalorder %s20, 1
      %p94 = por %p92, %p93
      %p95 = scmp.ne.s32.totalorder %s87, %s90
      %p96 = scmp.eq.s32.totalorder %s20, 0
      %p97 = por %p95, %p96
      %p98 = scmp.ne.s32.totalorder %s87, %s90
      %p99 = scmp.eq.s32.totalorder %s25, 1
      %p100 = por %p98, %p99
      %p101 = scmp.ne.s32.totalorder %s90, %s91
      %p102 = scmp.eq.s32.totalorder %s25, 0
      %p103 = por %p101, %p102
      %p104 = scmp.ne.s32.totalorder %s90, %s91
      %p105 = scmp.eq.s32.totalorder %s26, 1
      %p106 = por %p104, %p105
      %p108 = scmp.ne.s32.totalorder %s91, %s107
      %p109 = scmp.eq.s32.totalorder %s26, 0
      %p110 = por %p108, %p109
      %s111 = ssub.s32 %s29, %s38
      %p112 = scmp.eq.s32.totalorder %s111, 0
      %s114 = sadd.s32 %s113, 1
      %s115 = scalar_select %p112, %s113, %s114
      %p118 = pneg %p112
      %p119 = scmp.eq.s32.totalorder %s20, 1
      %p120 = por %p118, %p119
      %p121 = scmp.ne.s32.totalorder %s113, %s116
      %p122 = scmp.eq.s32.totalorder %s20, 0
      %p123 = por %p121, %p122
      %p124 = scmp.ne.s32.totalorder %s113, %s116
      %p125 = scmp.eq.s32.totalorder %s25, 1
      %p126 = por %p124, %p125
      %p127 = scmp.ne.s32.totalorder %s116, %s117
      %p128 = scmp.eq.s32.totalorder %s25, 0
      %p129 = por %p127, %p128
      %p130 = scmp.ne.s32.totalorder %s116, %s117
      %p131 = scmp.eq.s32.totalorder %s26, 1
      %p132 = por %p130, %p131
      %p134 = scmp.ne.s32.totalorder %s117, %s133
      %p135 = scmp.eq.s32.totalorder %s26, 0
      %p136 = por %p134, %p135
      %s137 = ssub.s32 %s29, %s38
      %p138 = scmp.eq.s32.totalorder %s137, 0
      %s140 = sadd.s32 %s139, 1
      %s141 = scalar_select %p138, %s139, %s140
      %p144 = pneg %p138
      %p145 = scmp.eq.s32.totalorder %s20, 1
      %p146 = por %p144, %p145
      %p147 = scmp.ne.s32.totalorder %s139, %s142
      %p148 = scmp.eq.s32.totalorder %s20, 0
      %p149 = por %p147, %p148
      %p150 = scmp.ne.s32.totalorder %s139, %s142
      %p151 = scmp.eq.s32.totalorder %s25, 1
      %p152 = por %p150, %p151
      %p153 = scmp.ne.s32.totalorder %s142, %s143
      %p154 = scmp.eq.s32.totalorder %s25, 0
      %p155 = por %p153, %p154
      %p156 = scmp.ne.s32.totalorder %s142, %s143
      %p157 = scmp.eq.s32.totalorder %s26, 1
      %p158 = por %p156, %p157
      %p160 = scmp.ne.s32.totalorder %s143, %s159
      %p161 = scmp.eq.s32.totalorder %s26, 0
      %p162 = por %p160, %p161
      %s163 = ssub.s32 %s27, %s46
      %s164 = ssub.s32 %s28, %s42
      %s165 = sor.u32 %s163, %s164
      %s166 = ssub.s32 %s29, %s38
      %s167 = sor.u32 %s165, %s166
      %p168 = scmp.eq.s32.totalorder %s167, 0
      %s170 = sadd.s32 %s169, 1
      %s171 = scalar_select %p168, %s169, %s170
      %p174 = pneg %p168
      %p175 = scmp.eq.s32.totalorder %s20, 1
      %p176 = por %p174, %p175
      %p177 = scmp.ne.s32.totalorder %s169, %s172
      %p178 = scmp.eq.s32.totalorder %s20, 0
      %p179 = por %p177, %p178
      %p180 = scmp.ne.s32.totalorder %s169, %s172
      %p181 = scmp.eq.s32.totalorder %s25, 1
      %p182 = por %p180, %p181
      %p183 = scmp.ne.s32.totalorder %s172, %s173
      %p184 = scmp.eq.s32.totalorder %s25, 0
      %p185 = por %p183, %p184
      %p186 = scmp.ne.s32.totalorder %s172, %s173
      %p187 = scmp.eq.s32.totalorder %s26, 1
      %p188 = por %p186, %p187
      %p190 = scmp.ne.s32.totalorder %s173, %s189
      %p191 = scmp.eq.s32.totalorder %s26, 0
      %p192 = por %p190, %p191
      %p193 = scmp.le.s32.totalorder 1, %s20
      %p194 = scmp.lt.s32.totalorder %s20, 3
      %p195 = pnand %p193, %p194
      %p196 = pneg %p195
      // Predicated region
      $region9: #{tpu_custom_call.1} parent=5 // pred_check
        _
      $region10: #{tpu_custom_call.1} parent=5 // pred_check_branch
        %198 = sbr.rel (%p195) target = $region12
      $region11: #{tpu_custom_call.1} parent=5 // pred_region
        %s199 = ssub.s32 %s20, 1
        // Predicated region
        $region13: #{tpu_custom_call.1} parent=11 // pred_check
          %p200 = pneg %p129
        $region14: #{tpu_custom_call.1} parent=11 // pred_check_branch
          %202 = sbr.rel (%p200) target = $region16
        $region15: #{tpu_custom_call.1} parent=11 // pred_region
          %s204 = ssub.s32 1024, 1024
          %205 = vsyncadd [#allocation6], %s204
          %s206 = smul.addr %s32, 128
          %s207 = scalar_lea.hbm %s2, %s206
          %s208 = sshll.u32 [#allocation7], 4
          %s209 = int_to_ptr.vmem [resolvable:$true] %s208
          %214 = dma.hbm_to_vmem [thread:$0]  %s207, 1024, %s209, [#allocation6], 128, 128, 8
        $region16: #{tpu_custom_call.1} parent=11 // pred_fallthru
          _
        // Predicated region
        $region17: #{tpu_custom_call.1} parent=11 // pred_check
          %p215 = pneg %p155
        $region18: #{tpu_custom_call.1} parent=11 // pred_check_branch
          %217 = sbr.rel (%p215) target = $region20
        $region19: #{tpu_custom_call.1} parent=11 // pred_region
          %s219 = ssub.s32 16, 16
          %220 = vsyncadd [#allocation9], %s219
          %s221 = smul.addr %s32, 16
          %s222 = scalar_lea.hbm %s3, %s221
          %s224 = sshll.u32 [#allocation8], 4
          %s225 = int_to_ptr.vmem [resolvable:$true] %s224
          %227 = dma.hbm_to_vmem [thread:$0]  %s222, 16, %s225, [#allocation9]
        $region20: #{tpu_custom_call.1} parent=11 // pred_fallthru
          _
      $region12: #{tpu_custom_call.1} parent=5 // pred_fallthru
        _
      %p228 = scmp.lt.s32.totalorder %s20, 2
      // Predicated region
      $region21: #{tpu_custom_call.1} parent=5 // pred_check
        %p229 = pneg %p228
      $region22: #{tpu_custom_call.1} parent=5 // pred_check_branch
        %231 = sbr.rel (%p229) target = $region24
      $region23: #{tpu_custom_call.1} parent=5 // pred_region
        // Predicated region
        $region25: #{tpu_custom_call.1} parent=23 // pred_check
          %p232 = pneg %p61
        $region26: #{tpu_custom_call.1} parent=23 // pred_check_branch
          %234 = sbr.rel (%p232) target = $region28
        $region27: #{tpu_custom_call.1} parent=23 // pred_region
          %s235 = sand.u32 %s51, 1
          %s236 = scalar_lea.sflag [#allocation3], %s235
          %s237 = sand.u32 %s51, 1
          %s238 = smul.addr %s237, 64
          %s239 = scalar_lea.vmem [#allocation2], %s238
          %s240 = smul.u32 8, %s28
          %s242 = ssub.s32 1024, 1024
          %243 = vsyncadd %s236, %s242
          %s244 = smul.addr %s27, 8
          %s245 = sadd.s32 %s240, %s244
          %s246 = smul.addr %s245, 128
          %s247 = scalar_lea.hbm %s0, %s246
          %s248 = sshll.u32 %s239, 4
          %s249 = int_to_ptr.vmem [resolvable:$true] %s248
          %254 = dma.hbm_to_vmem [thread:$0]  %s247, 1024, %s249, %s236, 128, 128, 8
        $region28: #{tpu_custom_call.1} parent=23 // pred_fallthru
          _
        // Predicated region
        $region29: #{tpu_custom_call.1} parent=23 // pred_check
          %p255 = pneg %p97
        $region30: #{tpu_custom_call.1} parent=23 // pred_check_branch
          %257 = sbr.rel (%p255) target = $region32
        $region31: #{tpu_custom_call.1} parent=23 // pred_region
          %s258 = sand.u32 %s20, 1
          %s259 = scalar_lea.sflag [#allocation6], %s258
          %s260 = sand.u32 %s87, 1
          %s261 = smul.addr %s260, 8
          %s262 = scalar_lea.vmem [#allocation5], %s261
          %s263 = smul.u32 %s28, 8
          %s264 = ssub.s32 %s263, 1
          %p265 = scmp.gt.s32.totalorder %s264, 0
          %s266 = scalar_select %p265, %s264, 0
          %s268 = ssub.s32 128, 128
          %269 = vsyncadd %s259, %s268
          %s270 = smul.addr %s27, 8
          %s271 = sadd.s32 %s266, %s270
          %s272 = smul.addr %s271, 128
          %s273 = scalar_lea.hbm %s1, %s272
          %s275 = sshll.u32 %s262, 4
          %s276 = int_to_ptr.vmem [resolvable:$true] %s275
          %278 = dma.hbm_to_vmem [thread:$0]  %s273, 128, %s276, %s259
        $region32: #{tpu_custom_call.1} parent=23 // pred_fallthru
          _
      $region24: #{tpu_custom_call.1} parent=5 // pred_fallthru
        _
      %p279 = scmp.le.s32.totalorder 1, %s20
      %p280 = scmp.lt.s32.totalorder %s20, 3
      %p281 = pnand %p279, %p280
      %p282 = pneg %p281
      // Predicated region
      $region33: #{tpu_custom_call.1} parent=5 // pred_check
        _
      $region34: #{tpu_custom_call.1} parent=5 // pred_check_branch
        %284 = sbr.rel (%p281) target = $region36
      $region35: #{tpu_custom_call.1} parent=5 // pred_region
        %s285 = ssub.s32 %s20, 1
        %s286 = sand.u32 %s54, 1
        %s287 = scalar_lea.sflag [#allocation3], %s286
        %s288 = sand.u32 %s54, 1
        %s289 = smul.addr %s288, 64
        %s290 = scalar_lea.vmem [#allocation2], %s289
        // Predicated region
        $region37: #{tpu_custom_call.1} parent=35 // pred_check
          %p291 = pneg %p67
        $region38: #{tpu_custom_call.1} parent=35 // pred_check_branch
          %293 = sbr.rel (%p291) target = $region40
        $region39: #{tpu_custom_call.1} parent=35 // pred_region
          %294 = dma.done %s287, 1024
        $region40: #{tpu_custom_call.1} parent=35 // pred_fallthru
          _
        %s295 = sand.u32 %s25, 1
        %s296 = scalar_lea.sflag [#allocation6], %s295
        %s297 = sand.u32 %s90, 1
        %s298 = smul.addr %s297, 8
        %s299 = scalar_lea.vmem [#allocation5], %s298
        // Predicated region
        $region41: #{tpu_custom_call.1} parent=35 // pred_check
          %p300 = pneg %p103
        $region42: #{tpu_custom_call.1} parent=35 // pred_check_branch
          %302 = sbr.rel (%p300) target = $region44
        $region43: #{tpu_custom_call.1} parent=35 // pred_region
          %303 = dma.done %s296, 128
        $region44: #{tpu_custom_call.1} parent=35 // pred_fallthru
          _
        // Predicated region
        $region45: #{tpu_custom_call.1} parent=35 // pred_check
          %p304 = pneg %p129
        $region46: #{tpu_custom_call.1} parent=35 // pred_check_branch
          %306 = sbr.rel (%p304) target = $region48
        $region47: #{tpu_custom_call.1} parent=35 // pred_region
          %307 = dma.done [#allocation6], 1024
        $region48: #{tpu_custom_call.1} parent=35 // pred_fallthru
          _
        // Predicated region
        $region49: #{tpu_custom_call.1} parent=35 // pred_check
          %p308 = pneg %p155
        $region50: #{tpu_custom_call.1} parent=35 // pred_check_branch
          %310 = sbr.rel (%p308) target = $region52
        $region51: #{tpu_custom_call.1} parent=35 // pred_region
          %311 = dma.done [#allocation9], 16
        $region52: #{tpu_custom_call.1} parent=35 // pred_fallthru
          _
        %s312 = sand.u32 %s54, 1
        %s313 = scalar_lea.sflag [#allocation3], %s312
        %s314 = sand.u32 %s54, 1
        %s315 = smul.addr %s314, 64
        %s316 = scalar_lea.vmem [#allocation2], %s315
        %p317 = pneg %p67
        %p318 = pneg %p64
        %s319 = sand.u32 %s25, 1
        %s320 = scalar_lea.sflag [#allocation6], %s319
        %s321 = sand.u32 %s90, 1
        %s322 = smul.addr %s321, 8
        %s323 = scalar_lea.vmem [#allocation5], %s322
        %p324 = pneg %p103
        %p325 = pneg %p100
        %p326 = pneg %p129
        %p327 = pneg %p126
        %p328 = pneg %p155
        %p329 = pneg %p152
        %p330 = pneg %p185
        %p331 = pneg %p182
        %s332 = sand.u32 %s172, 1
        %s333 = scalar_lea.sflag [#allocation4], %s332
        %s334 = sand.u32 %s172, 1
        %s335 = smul.addr %s334, 64
        %s336 = scalar_lea.vmem [#allocation10], %s335
        %s337 = smul.u32 8, %s31
        %s338 = smul.u32 %s31, 8
        %s339 = ssub.s32 %s338, 1
        %p340 = scmp.gt.s32.totalorder %s339, 0
        %s341 = scalar_select %p340, %s339, 0
        %s342 = smul.u32 8, %s31
        %v343 = vld [vmem:[%s290] sm:$0xff]
        %v344 = vld [vmem:[%s290 + $0x8] sm:$0xff]
        %v345 = vld [vmem:[%s290 + $0x10] sm:$0xff]
        %v346 = vld [vmem:[%s290 + $0x18] sm:$0xff]
        %v347 = vld [vmem:[%s290 + $0x20] sm:$0xff]
        %v348 = vld [vmem:[%s290 + $0x28] sm:$0xff]
        %v349 = vld [vmem:[%s290 + $0x30] sm:$0xff]
        %v350 = vld [vmem:[%s290 + $0x38] sm:$0xff]
        %v351 = vrot.slane %v343, 7
        %v352 = vrot.slane %v344, 7
        %v353 = vrot.slane %v345, 7
        %v354 = vrot.slane %v346, 7
        %v355 = vrot.slane %v347, 7
        %v356 = vrot.slane %v348, 7
        %v357 = vrot.slane %v349, 7
        %v358 = vrot.slane %v350, 7
        %v359 = vlaneseq
        %v360 = vshrl.u32 %v359, 7
        %vm361 = vcmp.lt.s32.totalorder %v360, 1
        %v362 = vsel %vm361, %v357, %v358
        %v363 = vsel %vm361, %v356, %v357
        %v364 = vsel %vm361, %v355, %v356
        %v365 = vsel %vm361, %v354, %v355
        %v366 = vsel %vm361, %v353, %v354
        %v367 = vsel %vm361, %v352, %v353
        %v368 = vsel %vm361, %v351, %v352
        %v369 = vsel %vm361, %v358, %v351
        %v370 = vadd.s32 %v360, 8
        %v371 = vadd.s32 %v360, 16
        %v372 = vadd.s32 %v360, 24
        %v373 = vadd.s32 %v360, 32
        %v374 = vadd.s32 %v360, 40
        %v375 = vadd.s32 %v360, 48
        %v376 = vadd.s32 %v360, 56
        %vm377 = vcmp.lt.s32.totalorder %v360, 0
        %v378 = vsub.s32 0, %v360
        %v379 = vsel %vm377, %v378, %v360
        %v380 = vshrl.u32 %v379, 3
        %v381 = vand.u32 %v379, 7
        %v382 = vsub.s32 0, %v381
        %v383 = vsel %vm377, %v382, %v381
        %vm384 = vcmp.lt.s32.totalorder %v370, 0
        %v385 = vsub.s32 0, %v370
        %v386 = vsel %vm384, %v385, %v370
        %v387 = vshrl.u32 %v386, 3
        %v388 = vand.u32 %v386, 7
        %v389 = vsub.s32 0, %v388
        %v390 = vsel %vm384, %v389, %v388
        %vm391 = vcmp.lt.s32.totalorder %v371, 0
        %v392 = vsub.s32 0, %v371
        %v393 = vsel %vm391, %v392, %v371
        %v394 = vshrl.u32 %v393, 3
        %v395 = vand.u32 %v393, 7
        %v396 = vsub.s32 0, %v395
        %v397 = vsel %vm391, %v396, %v395
        %vm398 = vcmp.lt.s32.totalorder %v372, 0
        %v399 = vsub.s32 0, %v372
        %v400 = vsel %vm398, %v399, %v372
        %v401 = vshrl.u32 %v400, 3
        %v402 = vand.u32 %v400, 7
        %v403 = vsub.s32 0, %v402
        %v404 = vsel %vm398, %v403, %v402
        %vm405 = vcmp.lt.s32.totalorder %v373, 0
        %v406 = vsub.s32 0, %v373
        %v407 = vsel %vm405, %v406, %v373
        %v408 = vshrl.u32 %v407, 3
        %v409 = vand.u32 %v407, 7
        %v410 = vsub.s32 0, %v409
        %v411 = vsel %vm405, %v410, %v409
        %vm412 = vcmp.lt.s32.totalorder %v374, 0
        %v413 = vsub.s32 0, %v374
        %v414 = vsel %vm412, %v413, %v374
        %v415 = vshrl.u32 %v414, 3
        %v416 = vand.u32 %v414, 7
        %v417 = vsub.s32 0, %v416
        %v418 = vsel %vm412, %v417, %v416
        %vm419 = vcmp.lt.s32.totalorder %v375, 0
        %v420 = vsub.s32 0, %v375
        %v421 = vsel %vm419, %v420, %v375
        %v422 = vshrl.u32 %v421, 3
        %v423 = vand.u32 %v421, 7
        %v424 = vsub.s32 0, %v423
        %v425 = vsel %vm419, %v424, %v423
        %vm426 = vcmp.lt.s32.totalorder %v376, 0
        %v427 = vsub.s32 0, %v376
        %v428 = vsel %vm426, %v427, %v376
        %v429 = vshrl.u32 %v428, 3
        %v430 = vand.u32 %v428, 7
        %v431 = vsub.s32 0, %v430
        %v432 = vsel %vm426, %v431, %v430
        %vm433 = vcmp.ne.s32.totalorder %v383, 0
        %vm434 = vcmp.ne.s32.totalorder %v390, 0
        %vm435 = vcmp.ne.s32.totalorder %v397, 0
        %vm436 = vcmp.ne.s32.totalorder %v404, 0
        %vm437 = vcmp.ne.s32.totalorder %v411, 0
        %vm438 = vcmp.ne.s32.totalorder %v418, 0
        %vm439 = vcmp.ne.s32.totalorder %v425, 0
        %vm440 = vcmp.ne.s32.totalorder %v432, 0
        %vm441 = vcmp.lt.s32.totalorder %v383, 0
        %vm442 = vcmp.lt.s32.totalorder %v390, 0
        %vm443 = vcmp.lt.s32.totalorder %v397, 0
        %vm444 = vcmp.lt.s32.totalorder %v404, 0
        %vm445 = vcmp.lt.s32.totalorder %v411, 0
        %vm446 = vcmp.lt.s32.totalorder %v418, 0
        %vm447 = vcmp.lt.s32.totalorder %v425, 0
        %vm448 = vcmp.lt.s32.totalorder %v432, 0
        %vm449 = vmand %vm441, %vm433
        %vm450 = vmand %vm442, %vm434
        %vm451 = vmand %vm443, %vm435
        %vm452 = vmand %vm444, %vm436
        %vm453 = vmand %vm445, %vm437
        %vm454 = vmand %vm446, %vm438
        %vm455 = vmand %vm447, %vm439
        %vm456 = vmand %vm448, %vm440
        %v457 = vadd.s32 %v383, 8
        %v458 = vadd.s32 %v390, 8
        %v459 = vadd.s32 %v397, 8
        %v460 = vadd.s32 %v404, 8
        %v461 = vadd.s32 %v411, 8
        %v462 = vadd.s32 %v418, 8
        %v463 = vadd.s32 %v425, 8
        %v464 = vadd.s32 %v432, 8
        %v465 = vsel %vm449, %v457, %v383
        %v466 = vsel %vm450, %v458, %v390
        %v467 = vsel %vm451, %v459, %v397
        %v468 = vsel %vm452, %v460, %v404
        %v469 = vsel %vm453, %v461, %v411
        %v470 = vsel %vm454, %v462, %v418
        %v471 = vsel %vm455, %v463, %v425
        %v472 = vsel %vm456, %v464, %v432
        %vm473 = vcmp.eq.s32.totalorder %v465, 0
        %vm474 = vcmp.eq.s32.totalorder %v466, 0
        %vm475 = vcmp.eq.s32.totalorder %v467, 0
        %vm476 = vcmp.eq.s32.totalorder %v468, 0
        %vm477 = vcmp.eq.s32.totalorder %v469, 0
        %vm478 = vcmp.eq.s32.totalorder %v470, 0
        %vm479 = vcmp.eq.s32.totalorder %v471, 0
        %vm480 = vcmp.eq.s32.totalorder %v472, 0
        %v481 = vsel %vm473, 0.0, %v369
        %v482 = vsel %vm474, 0.0, %v368
        %v483 = vsel %vm475, 0.0, %v367
        %v484 = vsel %vm476, 0.0, %v366
        %v485 = vsel %vm477, 0.0, %v365
        %v486 = vsel %vm478, 0.0, %v364
        %v487 = vsel %vm479, 0.0, %v363
        %v488 = vsel %vm480, 0.0, %v362
        %p489 = scmp.gt.s32.totalorder %s31, 0
        %v490 = vld [vmem:[%s299] sm:$0xff]
        %s491 = scalar_select %p489, 1, 0
        %v492 = vstv %s491
        %vm493 = vcmp.eq.s32.totalorder %v492, 1
        %v494 = vsel %vm493, %v490, 0.0
        %v495 = vrot.slane %v494, 7
        %vm496 = vcmp.eq.s32.totalorder %v360, 0
        %v497 = vsel %vm496, 0.0, %v495
        %v498 = vld [vmem:[#allocation7] sm:$0xff]
        %v499 = vld [vmem:[#allocation7 + $0x8] sm:$0xff]
        %s500 = scalar_lea.vmem [#allocation7], 16
        %v501 = vld [vmem:[%s500] sm:$0xff]
        %v502 = vld [vmem:[%s500 + $0x8] sm:$0xff]
        %vm503 = vcmask 130048
        %v505 = vsel %vm503, %v481, 0
        %v508 = vsel %vm503, %v482, 0
        %v511 = vsel %vm503, %v483, 0
        %v514 = vsel %vm503, %v484, 0
        %v517 = vsel %vm503, %v485, 0
        %v520 = vsel %vm503, %v486, 0
        %v523 = vsel %vm503, %v487, 0
        %v526 = vsel %vm503, %v488, 0
        %528 = vmatprep.subr.mxu0 0.0
        %529 = vmatpush1.msra.mxu0 %v501
        %530 = vmatprep.subr.mxu0 0.0
        %531 = vmatpush1.msra.mxu0 %v502
        %532 = vmatprep.subr.mxu0 0.0
        %533 = vmatpush1.msra.mxu0 0.0
        %534 = vmatprep.subr.mxu0 0.0
        %535 = vmatpush1.msra.mxu0 0.0
        %536 = vmatprep.subr.mxu0 0.0
        %537 = vmatpush1.msra.mxu0 0.0
        %538 = vmatprep.subr.mxu0 0.0
        %539 = vmatpush1.msra.mxu0 0.0
        %540 = vmatprep.subr.mxu0 0.0
        %541 = vmatpush1.msra.mxu0 0.0
        %542 = vmatprep.subr.mxu0 0.0
        %543 = vmatpush1.msra.mxu0 0.0
        %544 = vmatprep.subr.mxu0 0.0
        %545 = vmatpush1.msra.mxu0 0.0
        %546 = vmatprep.subr.mxu0 0.0
        %547 = vmatpush1.msra.mxu0 0.0
        %548 = vmatprep.subr.mxu0 0.0
        %549 = vmatpush1.msra.mxu0 0.0
        %550 = vmatprep.subr.mxu0 0.0
        %551 = vmatpush1.msra.mxu0 0.0
        %552 = vmatprep.subr.mxu0 0.0
        %553 = vmatpush1.msra.mxu0 0.0
        %554 = vmatprep.subr.mxu0 0.0
        %555 = vmatpush1.msra.mxu0 0.0
        %556 = vmatprep.subr.mxu0 0.0
        %557 = vmatpush1.msra.mxu0 0.0
        %558 = vmatprep.subr.mxu0 0.0
        %559 = vmatpush1.msra.mxu0 0.0
        %560 = vmatprep.subr.mxu0 0.0
        %561 = vmatpush1.msra.mxu0 0.0
        %562 = vmatprep.subr.mxu0 0.0
        %563 = vmatpush1.msra.mxu0 0.0
        %564 = vmatprep.subr.mxu0 0.0
        %565 = vmatpush1.msra.mxu0 0.0
        %566 = vmatprep.subr.mxu0 0.0
        %567 = vmatpush1.msra.mxu0 0.0
        %568 = vmatprep.subr.mxu0 0.0
        %569 = vmatpush1.msra.mxu0 0.0
        %570 = vmatprep.subr.mxu0 0.0
        %571 = vmatpush1.msra.mxu0 0.0
        %572 = vmatprep.subr.mxu0 0.0
        %573 = vmatpush1.msra.mxu0 0.0
        %574 = vmatprep.subr.mxu0 0.0
        %575 = vmatpush1.msra.mxu0 0.0
        %576 = vmatprep.subr.mxu0 0.0
        %577 = vmatpush1.msra.mxu0 0.0
        %578 = vmatprep.subr.mxu0 0.0
        %579 = vmatpush1.msra.mxu0 0.0
        %580 = vmatprep.subr.mxu0 0.0
        %581 = vmatpush1.msra.mxu0 0.0
        %582 = vmatprep.subr.mxu0 0.0
        %583 = vmatpush1.msra.mxu0 0.0
        %584 = vmatprep.subr.mxu0 0.0
        %585 = vmatpush1.msra.mxu0 0.0
        %586 = vmatprep.subr.mxu0 0.0
        %587 = vmatpush1.msra.mxu0 0.0
        %588 = vmatprep.subr.mxu0 0.0
        %589 = vmatpush1.msra.mxu0 0.0
        %590 = vmatprep.subr.mxu0 0.0
        %591 = vmatpush1.msra.mxu0 0.0
        %592 = vmatprep.mubr.f32.mxu0 0.0
        %593 = vmatmul.mubr.f32.gmra.mrb[0].mxu0 %v505
        %v594 = vpop.f32.mrb[0].mxu0
        %v595 = vadd.f32 0.0, %v594
        %v596 = vpop.f32.mrb[0].mxu0
        %597 = vmatprep.mubr.f32.mxu0 0.0
        %598 = vmatmul.mubr.f32.gmra.mrb[0].mxu0 %v508
        %v599 = vpop.f32.mrb[0].mxu0
        %v600 = vadd.f32 0.0, %v599
        %v601 = vpop.f32.mrb[0].mxu0
        %602 = vmatprep.mubr.f32.mxu0 0.0
        %603 = vmatmul.mubr.f32.gmra.mrb[0].mxu0 %v511
        %v604 = vpop.f32.mrb[0].mxu0
        %v605 = vadd.f32 0.0, %v604
        %v606 = vpop.f32.mrb[0].mxu0
        %607 = vmatprep.mubr.f32.mxu0 0.0
        %608 = vmatmul.mubr.f32.gmra.mrb[0].mxu0 %v514
        %v609 = vpop.f32.mrb[0].mxu0
        %v610 = vadd.f32 0.0, %v609
        %v611 = vpop.f32.mrb[0].mxu0
        %612 = vmatprep.mubr.f32.mxu0 0.0
        %613 = vmatmul.mubr.f32.gmra.mrb[0].mxu0 %v517
        %v614 = vpop.f32.mrb[0].mxu0
        %v615 = vadd.f32 0.0, %v614
        %v616 = vpop.f32.mrb[0].mxu0
        %617 = vmatprep.mubr.f32.mxu0 0.0
        %618 = vmatmul.mubr.f32.gmra.mrb[0].mxu0 %v520
        %v619 = vpop.f32.mrb[0].mxu0
        %v620 = vadd.f32 0.0, %v619
        %v621 = vpop.f32.mrb[0].mxu0
        %622 = vmatprep.mubr.f32.mxu0 0.0
        %623 = vmatmul.mubr.f32.gmra.mrb[0].mxu0 %v523
        %v624 = vpop.f32.mrb[0].mxu0
        %v625 = vadd.f32 0.0, %v624
        %v626 = vpop.f32.mrb[0].mxu0
        %627 = vmatprep.mubr.f32.mxu0 0.0
        %628 = vmatmul.mubr.f32.gmra.mrb[0].mxu0 %v526
        %v629 = vpop.f32.mrb[0].mxu0
        %v630 = vadd.f32 0.0, %v629
        %v631 = vpop.f32.mrb[0].mxu0
        %632 = vdwg.mxu0
        %v634 = vsel %vm503, %v343, 0
        %v637 = vsel %vm503, %v344, 0
        %v640 = vsel %vm503, %v345, 0
        %v643 = vsel %vm503, %v346, 0
        %v646 = vsel %vm503, %v347, 0
        %v649 = vsel %vm503, %v348, 0
        %v652 = vsel %vm503, %v349, 0
        %v655 = vsel %vm503, %v350, 0
        %657 = vmatprep.subr.mxu0 0.0
        %658 = vmatpush1.msra.mxu0 %v498
        %659 = vmatprep.subr.mxu0 0.0
        %660 = vmatpush1.msra.mxu0 %v499
        %661 = vmatprep.subr.mxu0 0.0
        %662 = vmatpush1.msra.mxu0 0.0
        %663 = vmatprep.subr.mxu0 0.0
        %664 = vmatpush1.msra.mxu0 0.0
        %665 = vmatprep.subr.mxu0 0.0
        %666 = vmatpush1.msra.mxu0 0.0
        %667 = vmatprep.subr.mxu0 0.0
        %668 = vmatpush1.msra.mxu0 0.0
        %669 = vmatprep.subr.mxu0 0.0
        %670 = vmatpush1.msra.mxu0 0.0
        %671 = vmatprep.subr.mxu0 0.0
        %672 = vmatpush1.msra.mxu0 0.0
        %673 = vmatprep.subr.mxu0 0.0
        %674 = vmatpush1.msra.mxu0 0.0
        %675 = vmatprep.subr.mxu0 0.0
        %676 = vmatpush1.msra.mxu0 0.0
        %677 = vmatprep.subr.mxu0 0.0
        %678 = vmatpush1.msra.mxu0 0.0
        %679 = vmatprep.subr.mxu0 0.0
        %680 = vmatpush1.msra.mxu0 0.0
        %681 = vmatprep.subr.mxu0 0.0
        %682 = vmatpush1.msra.mxu0 0.0
        %683 = vmatprep.subr.mxu0 0.0
        %684 = vmatpush1.msra.mxu0 0.0
        %685 = vmatprep.subr.mxu0 0.0
        %686 = vmatpush1.msra.mxu0 0.0
        %687 = vmatprep.subr.mxu0 0.0
        %688 = vmatpush1.msra.mxu0 0.0
        %689 = vmatprep.subr.mxu0 0.0
        %690 = vmatpush1.msra.mxu0 0.0
        %691 = vmatprep.subr.mxu0 0.0
        %692 = vmatpush1.msra.mxu0 0.0
        %693 = vmatprep.subr.mxu0 0.0
        %694 = vmatpush1.msra.mxu0 0.0
        %695 = vmatprep.subr.mxu0 0.0
        %696 = vmatpush1.msra.mxu0 0.0
        %697 = vmatprep.subr.mxu0 0.0
        %698 = vmatpush1.msra.mxu0 0.0
        %699 = vmatprep.subr.mxu0 0.0
        %700 = vmatpush1.msra.mxu0 0.0
        %701 = vmatprep.subr.mxu0 0.0
        %702 = vmatpush1.msra.mxu0 0.0
        %703 = vmatprep.subr.mxu0 0.0
        %704 = vmatpush1.msra.mxu0 0.0
        %705 = vmatprep.subr.mxu0 0.0
        %706 = vmatpush1.msra.mxu0 0.0
        %707 = vmatprep.subr.mxu0 0.0
        %708 = vmatpush1.msra.mxu0 0.0
        %709 = vmatprep.subr.mxu0 0.0
        %710 = vmatpush1.msra.mxu0 0.0
        %711 = vmatprep.subr.mxu0 0.0
        %712 = vmatpush1.msra.mxu0 0.0
        %713 = vmatprep.subr.mxu0 0.0
        %714 = vmatpush1.msra.mxu0 0.0
        %715 = vmatprep.subr.mxu0 0.0
        %716 = vmatpush1.msra.mxu0 0.0
        %717 = vmatprep.subr.mxu0 0.0
        %718 = vmatpush1.msra.mxu0 0.0
        %719 = vmatprep.subr.mxu0 0.0
        %720 = vmatpush1.msra.mxu0 0.0
        %721 = vmatprep.mubr.f32.mxu0 0.0
        %722 = vmatmul.mubr.f32.gmra.mrb[0].mxu0 %v634
        %v723 = vpop.f32.mrb[0].mxu0
        %v724 = vadd.f32 %v595, %v723
        %v725 = vpop.f32.mrb[0].mxu0
        %726 = vmatprep.mubr.f32.mxu0 0.0
        %727 = vmatmul.mubr.f32.gmra.mrb[0].mxu0 %v637
        %v728 = vpop.f32.mrb[0].mxu0
        %v729 = vadd.f32 %v600, %v728
        %v730 = vpop.f32.mrb[0].mxu0
        %731 = vmatprep.mubr.f32.mxu0 0.0
        %732 = vmatmul.mubr.f32.gmra.mrb[0].mxu0 %v640
        %v733 = vpop.f32.mrb[0].mxu0
        %v734 = vadd.f32 %v605, %v733
        %v735 = vpop.f32.mrb[0].mxu0
        %736 = vmatprep.mubr.f32.mxu0 0.0
        %737 = vmatmul.mubr.f32.gmra.mrb[0].mxu0 %v643
        %v738 = vpop.f32.mrb[0].mxu0
        %v739 = vadd.f32 %v610, %v738
        %v740 = vpop.f32.mrb[0].mxu0
        %741 = vmatprep.mubr.f32.mxu0 0.0
        %742 = vmatmul.mubr.f32.gmra.mrb[0].mxu0 %v646
        %v743 = vpop.f32.mrb[0].mxu0
        %v744 = vadd.f32 %v615, %v743
        %v745 = vpop.f32.mrb[0].mxu0
        %746 = vmatprep.mubr.f32.mxu0 0.0
        %747 = vmatmul.mubr.f32.gmra.mrb[0].mxu0 %v649
        %v748 = vpop.f32.mrb[0].mxu0
        %v749 = vadd.f32 %v620, %v748
        %v750 = vpop.f32.mrb[0].mxu0
        %751 = vmatprep.mubr.f32.mxu0 0.0
        %752 = vmatmul.mubr.f32.gmra.mrb[0].mxu0 %v652
        %v753 = vpop.f32.mrb[0].mxu0
        %v754 = vadd.f32 %v625, %v753
        %v755 = vpop.f32.mrb[0].mxu0
        %756 = vmatprep.mubr.f32.mxu0 0.0
        %757 = vmatmul.mubr.f32.gmra.mrb[0].mxu0 %v655
        %v758 = vpop.f32.mrb[0].mxu0
        %v759 = vadd.f32 %v630, %v758
        %v760 = vpop.f32.mrb[0].mxu0
        %761 = vdwg.mxu0
        %s762 = scalar_lea.vmem [#allocation7], 32
        %v763 = vld [vmem:[%s762] sm:$0xff]
        %v764 = vld [vmem:[%s762 + $0x8] sm:$0xff]
        %v766 = vsel %vm503, %v494, 0
        %768 = vmatprep.subr.mxu0 0.0
        %769 = vmatpush1.msra.mxu0 %v763
        %770 = vmatprep.subr.mxu0 0.0
        %771 = vmatpush1.msra.mxu0 %v764
        %772 = vmatprep.subr.mxu0 0.0
        %773 = vmatpush1.msra.mxu0 0.0
        %774 = vmatprep.subr.mxu0 0.0
        %775 = vmatpush1.msra.mxu0 0.0
        %776 = vmatprep.subr.mxu0 0.0
        %777 = vmatpush1.msra.mxu0 0.0
        %778 = vmatprep.subr.mxu0 0.0
        %779 = vmatpush1.msra.mxu0 0.0
        %780 = vmatprep.subr.mxu0 0.0
        %781 = vmatpush1.msra.mxu0 0.0
        %782 = vmatprep.subr.mxu0 0.0
        %783 = vmatpush1.msra.mxu0 0.0
        %784 = vmatprep.subr.mxu0 0.0
        %785 = vmatpush1.msra.mxu0 0.0
        %786 = vmatprep.subr.mxu0 0.0
        %787 = vmatpush1.msra.mxu0 0.0
        %788 = vmatprep.subr.mxu0 0.0
        %789 = vmatpush1.msra.mxu0 0.0
        %790 = vmatprep.subr.mxu0 0.0
        %791 = vmatpush1.msra.mxu0 0.0
        %792 = vmatprep.subr.mxu0 0.0
        %793 = vmatpush1.msra.mxu0 0.0
        %794 = vmatprep.subr.mxu0 0.0
        %795 = vmatpush1.msra.mxu0 0.0
        %796 = vmatprep.subr.mxu0 0.0
        %797 = vmatpush1.msra.mxu0 0.0
        %798 = vmatprep.subr.mxu0 0.0
        %799 = vmatpush1.msra.mxu0 0.0
        %800 = vmatprep.subr.mxu0 0.0
        %801 = vmatpush1.msra.mxu0 0.0
        %802 = vmatprep.subr.mxu0 0.0
        %803 = vmatpush1.msra.mxu0 0.0
        %804 = vmatprep.subr.mxu0 0.0
        %805 = vmatpush1.msra.mxu0 0.0
        %806 = vmatprep.subr.mxu0 0.0
        %807 = vmatpush1.msra.mxu0 0.0
        %808 = vmatprep.subr.mxu0 0.0
        %809 = vmatpush1.msra.mxu0 0.0
        %810 = vmatprep.subr.mxu0 0.0
        %811 = vmatpush1.msra.mxu0 0.0
        %812 = vmatprep.subr.mxu0 0.0
        %813 = vmatpush1.msra.mxu0 0.0
        %814 = vmatprep.subr.mxu0 0.0
        %815 = vmatpush1.msra.mxu0 0.0
        %816 = vmatprep.subr.mxu0 0.0
        %817 = vmatpush1.msra.mxu0 0.0
        %818 = vmatprep.subr.mxu0 0.0
        %819 = vmatpush1.msra.mxu0 0.0
        %820 = vmatprep.subr.mxu0 0.0
        %821 = vmatpush1.msra.mxu0 0.0
        %822 = vmatprep.subr.mxu0 0.0
        %823 = vmatpush1.msra.mxu0 0.0
        %824 = vmatprep.subr.mxu0 0.0
        %825 = vmatpush1.msra.mxu0 0.0
        %826 = vmatprep.subr.mxu0 0.0
        %827 = vmatpush1.msra.mxu0 0.0
        %828 = vmatprep.subr.mxu0 0.0
        %829 = vmatpush1.msra.mxu0 0.0
        %830 = vmatprep.subr.mxu0 0.0
        %831 = vmatpush1.msra.mxu0 0.0
        %832 = vmatprep.mubr.f32.mxu0 0.0
        %833 = vmatmul.mubr.f32.gmra.mrb[0].mxu0 %v766
        %v834 = vpop.f32.mrb[0].mxu0
        %v835 = vadd.f32 0.0, %v834
        %v836 = vpop.f32.mrb[0].mxu0
        %837 = vmatprep.mubr.f32.mxu0 0.0
        %838 = vmatmul.mubr.f32.gmra.mrb[0].mxu0 %v634
        %v839 = vpop.f32.mrb[0].mxu0
        %v840 = vadd.f32 0.0, %v839
        %v841 = vpop.f32.mrb[0].mxu0
        %842 = vmatprep.mubr.f32.mxu0 0.0
        %843 = vmatmul.mubr.f32.gmra.mrb[0].mxu0 %v637
        %v844 = vpop.f32.mrb[0].mxu0
        %v845 = vadd.f32 0.0, %v844
        %v846 = vpop.f32.mrb[0].mxu0
        %847 = vmatprep.mubr.f32.mxu0 0.0
        %848 = vmatmul.mubr.f32.gmra.mrb[0].mxu0 %v640
        %v849 = vpop.f32.mrb[0].mxu0
        %v850 = vadd.f32 0.0, %v849
        %v851 = vpop.f32.mrb[0].mxu0
        %852 = vmatprep.mubr.f32.mxu0 0.0
        %853 = vmatmul.mubr.f32.gmra.mrb[0].mxu0 %v643
        %v854 = vpop.f32.mrb[0].mxu0
        %v855 = vadd.f32 0.0, %v854
        %v856 = vpop.f32.mrb[0].mxu0
        %857 = vmatprep.mubr.f32.mxu0 0.0
        %858 = vmatmul.mubr.f32.gmra.mrb[0].mxu0 %v646
        %v859 = vpop.f32.mrb[0].mxu0
        %v860 = vadd.f32 0.0, %v859
        %v861 = vpop.f32.mrb[0].mxu0
        %862 = vmatprep.mubr.f32.mxu0 0.0
        %863 = vmatmul.mubr.f32.gmra.mrb[0].mxu0 %v649
        %v864 = vpop.f32.mrb[0].mxu0
        %v865 = vadd.f32 0.0, %v864
        %v866 = vpop.f32.mrb[0].mxu0
        %867 = vmatprep.mubr.f32.mxu0 0.0
        %868 = vmatmul.mubr.f32.gmra.mrb[0].mxu0 %v652
        %v869 = vpop.f32.mrb[0].mxu0
        %v870 = vadd.f32 0.0, %v869
        %v871 = vpop.f32.mrb[0].mxu0
        %872 = vdwg.mxu0
        %v873 = vadd.f32 %v724, %v835
        %v874 = vadd.f32 %v729, %v840
        %v875 = vadd.f32 %v734, %v845
        %v876 = vadd.f32 %v739, %v850
        %v877 = vadd.f32 %v744, %v855
        %v878 = vadd.f32 %v749, %v860
        %v879 = vadd.f32 %v754, %v865
        %v880 = vadd.f32 %v759, %v870
        %s881 = scalar_lea.vmem [#allocation7], 48
        %v882 = vld [vmem:[%s881] sm:$0xff]
        %v883 = vld [vmem:[%s881 + $0x8] sm:$0xff]
        %v885 = vsel %vm503, %v497, 0
        %887 = vmatprep.subr.mxu0 0.0
        %888 = vmatpush1.msra.mxu0 %v882
        %889 = vmatprep.subr.mxu0 0.0
        %890 = vmatpush1.msra.mxu0 %v883
        %891 = vmatprep.subr.mxu0 0.0
        %892 = vmatpush1.msra.mxu0 0.0
        %893 = vmatprep.subr.mxu0 0.0
        %894 = vmatpush1.msra.mxu0 0.0
        %895 = vmatprep.subr.mxu0 0.0
        %896 = vmatpush1.msra.mxu0 0.0
        %897 = vmatprep.subr.mxu0 0.0
        %898 = vmatpush1.msra.mxu0 0.0
        %899 = vmatprep.subr.mxu0 0.0
        %900 = vmatpush1.msra.mxu0 0.0
        %901 = vmatprep.subr.mxu0 0.0
        %902 = vmatpush1.msra.mxu0 0.0
        %903 = vmatprep.subr.mxu0 0.0
        %904 = vmatpush1.msra.mxu0 0.0
        %905 = vmatprep.subr.mxu0 0.0
        %906 = vmatpush1.msra.mxu0 0.0
        %907 = vmatprep.subr.mxu0 0.0
        %908 = vmatpush1.msra.mxu0 0.0
        %909 = vmatprep.subr.mxu0 0.0
        %910 = vmatpush1.msra.mxu0 0.0
        %911 = vmatprep.subr.mxu0 0.0
        %912 = vmatpush1.msra.mxu0 0.0
        %913 = vmatprep.subr.mxu0 0.0
        %914 = vmatpush1.msra.mxu0 0.0
        %915 = vmatprep.subr.mxu0 0.0
        %916 = vmatpush1.msra.mxu0 0.0
        %917 = vmatprep.subr.mxu0 0.0
        %918 = vmatpush1.msra.mxu0 0.0
        %919 = vmatprep.subr.mxu0 0.0
        %920 = vmatpush1.msra.mxu0 0.0
        %921 = vmatprep.subr.mxu0 0.0
        %922 = vmatpush1.msra.mxu0 0.0
        %923 = vmatprep.subr.mxu0 0.0
        %924 = vmatpush1.msra.mxu0 0.0
        %925 = vmatprep.subr.mxu0 0.0
        %926 = vmatpush1.msra.mxu0 0.0
        %927 = vmatprep.subr.mxu0 0.0
        %928 = vmatpush1.msra.mxu0 0.0
        %929 = vmatprep.subr.mxu0 0.0
        %930 = vmatpush1.msra.mxu0 0.0
        %931 = vmatprep.subr.mxu0 0.0
        %932 = vmatpush1.msra.mxu0 0.0
        %933 = vmatprep.subr.mxu0 0.0
        %934 = vmatpush1.msra.mxu0 0.0
        %935 = vmatprep.subr.mxu0 0.0
        %936 = vmatpush1.msra.mxu0 0.0
        %937 = vmatprep.subr.mxu0 0.0
        %938 = vmatpush1.msra.mxu0 0.0
        %939 = vmatprep.subr.mxu0 0.0
        %940 = vmatpush1.msra.mxu0 0.0
        %941 = vmatprep.subr.mxu0 0.0
        %942 = vmatpush1.msra.mxu0 0.0
        %943 = vmatprep.subr.mxu0 0.0
        %944 = vmatpush1.msra.mxu0 0.0
        %945 = vmatprep.subr.mxu0 0.0
        %946 = vmatpush1.msra.mxu0 0.0
        %947 = vmatprep.subr.mxu0 0.0
        %948 = vmatpush1.msra.mxu0 0.0
        %949 = vmatprep.subr.mxu0 0.0
        %950 = vmatpush1.msra.mxu0 0.0
        %951 = vmatprep.mubr.f32.mxu0 0.0
        %952 = vmatmul.mubr.f32.gmra.mrb[0].mxu0 %v885
        %v953 = vpop.f32.mrb[0].mxu0
        %v954 = vadd.f32 0.0, %v953
        %v955 = vpop.f32.mrb[0].mxu0
        %956 = vmatprep.mubr.f32.mxu0 0.0
        %957 = vmatmul.mubr.f32.gmra.mrb[0].mxu0 %v505
        %v958 = vpop.f32.mrb[0].mxu0
        %v959 = vadd.f32 0.0, %v958
        %v960 = vpop.f32.mrb[0].mxu0
        %961 = vmatprep.mubr.f32.mxu0 0.0
        %962 = vmatmul.mubr.f32.gmra.mrb[0].mxu0 %v508
        %v963 = vpop.f32.mrb[0].mxu0
        %v964 = vadd.f32 0.0, %v963
        %v965 = vpop.f32.mrb[0].mxu0
        %966 = vmatprep.mubr.f32.mxu0 0.0
        %967 = vmatmul.mubr.f32.gmra.mrb[0].mxu0 %v511
        %v968 = vpop.f32.mrb[0].mxu0
        %v969 = vadd.f32 0.0, %v968
        %v970 = vpop.f32.mrb[0].mxu0
        %971 = vmatprep.mubr.f32.mxu0 0.0
        %972 = vmatmul.mubr.f32.gmra.mrb[0].mxu0 %v514
        %v973 = vpop.f32.mrb[0].mxu0
        %v974 = vadd.f32 0.0, %v973
        %v975 = vpop.f32.mrb[0].mxu0
        %976 = vmatprep.mubr.f32.mxu0 0.0
        %977 = vmatmul.mubr.f32.gmra.mrb[0].mxu0 %v517
        %v978 = vpop.f32.mrb[0].mxu0
        %v979 = vadd.f32 0.0, %v978
        %v980 = vpop.f32.mrb[0].mxu0
        %981 = vmatprep.mubr.f32.mxu0 0.0
        %982 = vmatmul.mubr.f32.gmra.mrb[0].mxu0 %v520
        %v983 = vpop.f32.mrb[0].mxu0
        %v984 = vadd.f32 0.0, %v983
        %v985 = vpop.f32.mrb[0].mxu0
        %986 = vmatprep.mubr.f32.mxu0 0.0
        %987 = vmatmul.mubr.f32.gmra.mrb[0].mxu0 %v523
        %v988 = vpop.f32.mrb[0].mxu0
        %v989 = vadd.f32 0.0, %v988
        %v990 = vpop.f32.mrb[0].mxu0
        %991 = vdwg.mxu0
        %v992 = vadd.f32 %v873, %v954
        %v993 = vadd.f32 %v874, %v959
        %v994 = vadd.f32 %v875, %v964
        %v995 = vadd.f32 %v876, %v969
        %v996 = vadd.f32 %v877, %v974
        %v997 = vadd.f32 %v878, %v979
        %v998 = vadd.f32 %v879, %v984
        %v999 = vadd.f32 %v880, %v989
        %v1000 = vld [vmem:[#allocation8] sm:$0x1]
        %v1002 = vlaneseq
        %v1003 = vshrl.u32 %v1002, 7
        %v1004 = vsub.s32 0, %v1003
        %v1005 = vrot.slane %v1000, %v1004
        %v1007 = vadd.f32 %v992, %v1005
        %v1008 = vadd.f32 %v993, %v1005
        %v1009 = vadd.f32 %v994, %v1005
        %v1010 = vadd.f32 %v995, %v1005
        %v1011 = vadd.f32 %v996, %v1005
        %v1012 = vadd.f32 %v997, %v1005
        %v1013 = vadd.f32 %v998, %v1005
        %v1014 = vadd.f32 %v999, %v1005
        %vm1015 = vcmask 31744
        %1016 = vst.msk [vmem:[%s336] sm:$0xff] %vm1015, %v1007
        %1017 = vst.msk [vmem:[%s336 + $0x8] sm:$0xff] %vm1015, %v1008
        %1018 = vst.msk [vmem:[%s336 + $0x10] sm:$0xff] %vm1015, %v1009
        %1019 = vst.msk [vmem:[%s336 + $0x18] sm:$0xff] %vm1015, %v1010
        %1020 = vst.msk [vmem:[%s336 + $0x20] sm:$0xff] %vm1015, %v1011
        %1021 = vst.msk [vmem:[%s336 + $0x28] sm:$0xff] %vm1015, %v1012
        %1022 = vst.msk [vmem:[%s336 + $0x30] sm:$0xff] %vm1015, %v1013
        %1023 = vst.msk [vmem:[%s336 + $0x38] sm:$0xff] %vm1015, %v1014
        %s1024 = sand.u32 %s172, 1
        %s1025 = scalar_lea.sflag [#allocation4], %s1024
        %s1026 = sand.u32 %s172, 1
        %s1027 = smul.addr %s1026, 64
        %s1028 = scalar_lea.vmem [#allocation10], %s1027
        // Predicated region
        $region53: #{tpu_custom_call.1} parent=35 // pred_check
          %p1029 = pneg %p182
        $region54: #{tpu_custom_call.1} parent=35 // pred_check_branch
          %1031 = sbr.rel (%p1029) target = $region56
        $region55: #{tpu_custom_call.1} parent=35 // pred_region
          %s1032 = smul.u32 8, %s31
          %s1034 = ssub.s32 1024, 1024
          %1035 = vsyncadd %s1025, %s1034
          %s1036 = sadd.s32 %s32, %s1032
          %s1037 = smul.addr %s30, 8
          %s1038 = sadd.s32 %s1036, %s1037
          %s1039 = smul.addr %s1038, 128
          %s1040 = scalar_lea.hbm %s4, %s1039
          %s1041 = sshll.u32 %s1028, 4
          %s1042 = int_to_ptr.vmem [resolvable:$true] %s1041
          %1047 = dma.vmem_to_hbm [thread:$0]  %s1042, 1024, %s1040, %s1025, 128, 128, 8
        $region56: #{tpu_custom_call.1} parent=35 // pred_fallthru
          _
      $region36: #{tpu_custom_call.1} parent=5 // pred_fallthru
        _
      %p1048 = scmp.le.s32.totalorder 2, %s20
      // Predicated region
      $region57: #{tpu_custom_call.1} parent=5 // pred_check
        %p1049 = pneg %p1048
      $region58: #{tpu_custom_call.1} parent=5 // pred_check_branch
        %1051 = sbr.rel (%p1049) target = $region60
      $region59: #{tpu_custom_call.1} parent=5 // pred_region
        %s1052 = ssub.s32 %s20, 2
        // Predicated region
        $region61: #{tpu_custom_call.1} parent=59 // pred_check
          %p1053 = pneg %p188
        $region62: #{tpu_custom_call.1} parent=59 // pred_check_branch
          %1055 = sbr.rel (%p1053) target = $region64
        $region63: #{tpu_custom_call.1} parent=59 // pred_region
          %s1056 = sand.u32 %s173, 1
          %s1057 = scalar_lea.sflag [#allocation4], %s1056
          %s1058 = sand.u32 %s173, 1
          %s1059 = smul.addr %s1058, 64
          %s1060 = scalar_lea.vmem [#allocation10], %s1059
          %1061 = dma.done %s1057, 1024
        $region64: #{tpu_custom_call.1} parent=59 // pred_fallthru
          _
      $region60: #{tpu_custom_call.1} parent=5 // pred_fallthru
        _
    $region6: #{tpu_custom_call.1} parent=1 // loop_footer
      %s24 = sadd.s32 1, %s20
    $region7: #{tpu_custom_call.1} parent=1 // loop_footer_branch
      %19 = sbr.rel target = $region3
    $region8: #{tpu_custom_call.1} parent=1 // loop_exit
      _
    %1062 = vsyncpa [#allocation3], 1
    %s1063 = scalar_lea.sflag [#allocation3], 1
    %1064 = vsyncpa %s1063, 1
    %1065 = vsyncpa [#allocation6], 1
    %s1066 = scalar_lea.sflag [#allocation6], 1
    %1067 = vsyncpa %s1066, 1
    %1068 = vsyncpa [#allocation9], 1
    %1069 = vsyncpa [#allocation4], 1
    %s1070 = scalar_lea.sflag [#allocation4], 1
    %1071 = vsyncpa %s1070, 1

</llo_original>
